<compile_context>
chip_gen: v5e
topology: v5e:2x2
jax: 0.10.0
libtpu: 0.0.40
codegen_flags: <defaults>
</compile_context>

<pallas_src>
import functools
import math

import jax
import jax.numpy as jnp
from jax.experimental import pallas as pl
from jax.experimental.pallas import tpu as pltpu


_RESIDENT_TABLE_BYTES = 8 * 1024 * 1024   # small-table (VMEM-resident) threshold


def _pad_table(embedding_table):
    """Pad d_model up to a multiple of 128 lanes. Call ONCE at parameter init
    (no-op when d_model % 128 == 0) — never per forward call."""
    _, d = embedding_table.shape
    d_pad = -(-d // 128) * 128
    if d_pad != d:
        embedding_table = jnp.pad(embedding_table, ((0, 0), (0, d_pad - d)))
    return embedding_table


def _resident_gather_kernel(ids_ref, n_ref, table_ref, out_ref, *,
                            tokens_per_block, scale):
    """Small-table path: table resident in VMEM; gather rows via dynamic slices."""
    del n_ref  # padded ids are clamped to 0 -> harmless cheap VMEM reads
    base = pl.program_id(0) * tokens_per_block
    for t in range(tokens_per_block):
        row = ids_ref[base + t]
        out_ref[pl.ds(t, 1), :] = table_ref[pl.ds(row, 1), :]
    # Scale in f32, in place, then cast back to the table dtype.
    out_ref[...] = (out_ref[...].astype(jnp.float32) * scale).astype(out_ref.dtype)


def _hbm_gather_kernel(ids_ref, n_ref, table_ref, out_ref, sem, *,
                       tokens_per_block, scale):
    """Large-table path: table stays in HBM; per-row DMAs straight into out_ref."""
    base = pl.program_id(0) * tokens_per_block
    n_tok = n_ref[0]

    # Start every row copy (shared DMA semaphore) before waiting on any, so all
    # tokens_per_block copies are in flight and per-row HBM latency is hidden.
    for t in range(tokens_per_block):
        row = ids_ref[base + t]

        @pl.when(base + t < n_tok)          # skip padded tail tokens entirely
        def _(row=row, t=t):
            pltpu.make_async_copy(
                table_ref.at[pl.ds(row, 1), :],
                out_ref.at[pl.ds(t, 1), :],
                sem,
            ).start()

    # Matched waits on the same shared semaphore (same per-copy byte count).
    for t in range(tokens_per_block):
        @pl.when(base + t < n_tok)
        def _(t=t):
            pltpu.make_async_copy(
                table_ref.at[pl.ds(0, 1), :],
                out_ref.at[pl.ds(t, 1), :],
                sem,
            ).wait()

    # Scale in f32 (avoids a second bf16 rounding for bf16 tables), in place.
    out_ref[...] = (out_ref[...].astype(jnp.float32) * scale).astype(out_ref.dtype)


def input_embeddings(x_ids, padded_table, d_model, *, force_hbm_gather=False):
    """x_ids: (batch, seq) int ids; padded_table: (vocab, d_pad) with d_pad % 128 == 0
    (use _pad_table once at init).  Returns (batch, seq, d_model) ==
    table[x_ids, :d_model] * sqrt(d_model)."""
    batch, seq = x_ids.shape
    vocab_size, d_pad = padded_table.shape
    assert d_pad % 128 == 0 and d_pad >= d_model
    n = batch * seq
    scale = math.sqrt(d_model)
    out_dtype = padded_table.dtype
    itemsize = jnp.dtype(out_dtype).itemsize

    # ---- token-block size: sublane-aligned, tile capped at ~4 MB (v7x-friendly),
    # ---- at least 2 blocks, and an even block count for v7x megacore balance.
    row_bytes = d_pad * itemsize
    max_tile_bytes = 4 * 1024 * 1024
    tb = min(128, max(8, (max_tile_bytes // row_bytes) // 8 * 8))
    while tb > 8 and -(-n // tb) < 2:
        tb //= 2
    num_blocks = -(-n // tb)
    if num_blocks % 2:
        num_blocks += 1
    n_pad = num_blocks * tb
    tile_bytes = tb * d_pad * itemsize

    # ---- ids: clamp (guards the data-dependent DMA addresses) and pad.
    ids = jnp.clip(x_ids.reshape(-1).astype(jnp.int32), 0, vocab_size - 1)
    if n_pad != n:
        ids = jnp.pad(ids, (0, n_pad - n))
    n_arr = jnp.array([n], dtype=jnp.int32)

    table_bytes = vocab_size * d_pad * itemsize
    resident = (table_bytes <= _RESIDENT_TABLE_BYTES) and not force_hbm_gather

    out_spec = pl.BlockSpec((tb, d_pad), lambda i, ids, nn: (i, 0))

    if resident:
        kernel = functools.partial(_resident_gather_kernel,
                                   tokens_per_block=tb, scale=scale)
        in_specs = [pl.BlockSpec((vocab_size, d_pad), lambda i, ids, nn: (0, 0))]
        scratch_shapes = []
        # resident table (double-buffered by the pipeline) + out tiles + headroom
        vmem_bytes = 2 * table_bytes + 3 * tile_bytes + (1 << 20)
    else:
        kernel = functools.partial(_hbm_gather_kernel,
                                   tokens_per_block=tb, scale=scale)
        in_specs = [pl.BlockSpec(memory_space=pl.ANY)]      # table stays in HBM
        scratch_shapes = [pltpu.SemaphoreType.DMA]           # single shared DMA sem
        vmem_bytes = 3 * tile_bytes + (1 << 20)               # ~3x out tile + headroom
    vmem_bytes = max(int(vmem_bytes), 4 * 1024 * 1024)

    out = pl.pallas_call(
        kernel,
        out_shape=jax.ShapeDtypeStruct((n_pad, d_pad), out_dtype),
        grid_spec=pltpu.PrefetchScalarGridSpec(
            num_scalar_prefetch=2,                 # ids, n  -> SMEM
            grid=(num_blocks,),
            in_specs=in_specs,
            out_specs=out_spec,
            scratch_shapes=scratch_shapes,
        ),
        compiler_params=pltpu.CompilerParams(
            dimension_semantics=("parallel",),     # megacore-shard token blocks
            vmem_limit_bytes=vmem_bytes,
        ),
    )(ids, n_arr, padded_table)

    return out[:n, :d_model].reshape(batch, seq, d_model)


if __name__ == "__main__":
    d_model = 32
    vocab_size = 64
    batch, seq = 2, 8

    key = jax.random.PRNGKey(0)
    k_tab, k_ids = jax.random.split(key)

    # Deterministic parameter init (nn.Embedding default ~ N(0, 1)).
    embedding_table = jax.random.normal(k_tab, (vocab_size, d_model),
                                        dtype=jnp.float32)
    x_ids = jax.random.randint(k_ids, (batch, seq), 0, vocab_size,
                               dtype=jnp.int32)

    # Pad the table once at "parameter init" (no-op when d_model % 128 == 0).
    padded_table = _pad_table(embedding_table)

    ref = embedding_table[x_ids] * math.sqrt(d_model)

    # Small-table VMEM-resident path (auto-selected at this size).
    out = jax.block_until_ready(input_embeddings(x_ids, padded_table, d_model))
    assert out.shape == (batch, seq, d_model)
    assert jnp.allclose(out, ref, atol=1e-5, rtol=1e-5)

    # Large-table HBM row-gather path (forced here to exercise both code paths).
    out2 = jax.block_until_ready(
        input_embeddings(x_ids, padded_table, d_model, force_hbm_gather=True))
    assert jnp.allclose(out2, ref, atol=1e-5, rtol=1e-5)

    print("KERNEL_OK")
</pallas_src>

<mosaic_0001>
module attributes {stable_mosaic.version = 11 : i64} {
  func.func @_resident_gather_kernel(%arg0: i32, %arg1: memref<16xi32, #tpu.memory_space<smem>>, %arg2: memref<1xi32, #tpu.memory_space<smem>>, %arg3: memref<64x128xf32, #tpu.memory_space<vmem>>, %arg4: memref<8x128xf32, #tpu.memory_space<vmem>>) attributes {dimension_semantics = [#tpu.dimension_semantics<parallel>], iteration_bounds = array<i64: 2>, scalar_prefetch = 2 : i64, scratch_operands = 0 : i64, tpu.core_type = #tpu.core_type<tc>, window_params = [{pipeline_mode = #tpu.pipeline_mode<synchronous>, transform_indices = @transform_0, window_bounds = array<i64: 64, 128>}, {transform_indices = @transform_1, window_bounds = array<i64: 8, 128>}]} {
    %c8_i32 = arith.constant 8 : i32
    %0 = arith.muli %arg0, %c8_i32 : i32
    %c0_i32 = arith.constant 0 : i32
    %1 = arith.addi %0, %c0_i32 : i32
    %2 = arith.index_cast %1 : i32 to index
    %3 = memref.load %arg1[%2] : memref<16xi32, #tpu.memory_space<smem>>
    %4 = arith.index_cast %3 : i32 to index
    %c0 = arith.constant 0 : index
    %5 = vector.load %arg3[%4, %c0] : memref<64x128xf32, #tpu.memory_space<vmem>>, vector<1x128xf32>
    %c0_0 = arith.constant 0 : index
    %c0_1 = arith.constant 0 : index
    %6 = vector.load %arg4[%c0_0, %c0_1] : memref<8x128xf32, #tpu.memory_space<vmem>>, vector<1x128xf32>
    tpu.vector_store %arg4[%c0_0, %c0_1], %5 {strides = array<i32>} : memref<8x128xf32, #tpu.memory_space<vmem>>, vector<1x128xf32>,
    %c1_i32 = arith.constant 1 : i32
    %7 = arith.addi %0, %c1_i32 : i32
    %8 = arith.index_cast %7 : i32 to index
    %9 = memref.load %arg1[%8] : memref<16xi32, #tpu.memory_space<smem>>
    %10 = arith.index_cast %9 : i32 to index
    %c0_2 = arith.constant 0 : index
    %11 = vector.load %arg3[%10, %c0_2] : memref<64x128xf32, #tpu.memory_space<vmem>>, vector<1x128xf32>
    %c1 = arith.constant 1 : index
    %c0_3 = arith.constant 0 : index
    %12 = vector.load %arg4[%c1, %c0_3] : memref<8x128xf32, #tpu.memory_space<vmem>>, vector<1x128xf32>
    tpu.vector_store %arg4[%c1, %c0_3], %11 {strides = array<i32>} : memref<8x128xf32, #tpu.memory_space<vmem>>, vector<1x128xf32>,
    %c2_i32 = arith.constant 2 : i32
    %13 = arith.addi %0, %c2_i32 : i32
    %14 = arith.index_cast %13 : i32 to index
    %15 = memref.load %arg1[%14] : memref<16xi32, #tpu.memory_space<smem>>
    %16 = arith.index_cast %15 : i32 to index
    %c0_4 = arith.constant 0 : index
    %17 = vector.load %arg3[%16, %c0_4] : memref<64x128xf32, #tpu.memory_space<vmem>>, vector<1x128xf32>
    %c2 = arith.constant 2 : index
    %c0_5 = arith.constant 0 : index
    %18 = vector.load %arg4[%c2, %c0_5] : memref<8x128xf32, #tpu.memory_space<vmem>>, vector<1x128xf32>
    tpu.vector_store %arg4[%c2, %c0_5], %17 {strides = array<i32>} : memref<8x128xf32, #tpu.memory_space<vmem>>, vector<1x128xf32>,
    %c3_i32 = arith.constant 3 : i32
    %19 = arith.addi %0, %c3_i32 : i32
    %20 = arith.index_cast %19 : i32 to index
    %21 = memref.load %arg1[%20] : memref<16xi32, #tpu.memory_space<smem>>
    %22 = arith.index_cast %21 : i32 to index
    %c0_6 = arith.constant 0 : index
    %23 = vector.load %arg3[%22, %c0_6] : memref<64x128xf32, #tpu.memory_space<vmem>>, vector<1x128xf32>
    %c3 = arith.constant 3 : index
    %c0_7 = arith.constant 0 : index
    %24 = vector.load %arg4[%c3, %c0_7] : memref<8x128xf32, #tpu.memory_space<vmem>>, vector<1x128xf32>
    tpu.vector_store %arg4[%c3, %c0_7], %23 {strides = array<i32>} : memref<8x128xf32, #tpu.memory_space<vmem>>, vector<1x128xf32>,
    %c4_i32 = arith.constant 4 : i32
    %25 = arith.addi %0, %c4_i32 : i32
    %26 = arith.index_cast %25 : i32 to index
    %27 = memref.load %arg1[%26] : memref<16xi32, #tpu.memory_space<smem>>
    %28 = arith.index_cast %27 : i32 to index
    %c0_8 = arith.constant 0 : index
    %29 = vector.load %arg3[%28, %c0_8] : memref<64x128xf32, #tpu.memory_space<vmem>>, vector<1x128xf32>
    %c4 = arith.constant 4 : index
    %c0_9 = arith.constant 0 : index
    %30 = vector.load %arg4[%c4, %c0_9] : memref<8x128xf32, #tpu.memory_space<vmem>>, vector<1x128xf32>
    tpu.vector_store %arg4[%c4, %c0_9], %29 {strides = array<i32>} : memref<8x128xf32, #tpu.memory_space<vmem>>, vector<1x128xf32>,
    %c5_i32 = arith.constant 5 : i32
    %31 = arith.addi %0, %c5_i32 : i32
    %32 = arith.index_cast %31 : i32 to index
    %33 = memref.load %arg1[%32] : memref<16xi32, #tpu.memory_space<smem>>
    %34 = arith.index_cast %33 : i32 to index
    %c0_10 = arith.constant 0 : index
    %35 = vector.load %arg3[%34, %c0_10] : memref<64x128xf32, #tpu.memory_space<vmem>>, vector<1x128xf32>
    %c5 = arith.constant 5 : index
    %c0_11 = arith.constant 0 : index
    %36 = vector.load %arg4[%c5, %c0_11] : memref<8x128xf32, #tpu.memory_space<vmem>>, vector<1x128xf32>
    tpu.vector_store %arg4[%c5, %c0_11], %35 {strides = array<i32>} : memref<8x128xf32, #tpu.memory_space<vmem>>, vector<1x128xf32>,
    %c6_i32 = arith.constant 6 : i32
    %37 = arith.addi %0, %c6_i32 : i32
    %38 = arith.index_cast %37 : i32 to index
    %39 = memref.load %arg1[%38] : memref<16xi32, #tpu.memory_space<smem>>
    %40 = arith.index_cast %39 : i32 to index
    %c0_12 = arith.constant 0 : index
    %41 = vector.load %arg3[%40, %c0_12] : memref<64x128xf32, #tpu.memory_space<vmem>>, vector<1x128xf32>
    %c6 = arith.constant 6 : index
    %c0_13 = arith.constant 0 : index
    %42 = vector.load %arg4[%c6, %c0_13] : memref<8x128xf32, #tpu.memory_space<vmem>>, vector<1x128xf32>
    tpu.vector_store %arg4[%c6, %c0_13], %41 {strides = array<i32>} : memref<8x128xf32, #tpu.memory_space<vmem>>, vector<1x128xf32>,
    %c7_i32 = arith.constant 7 : i32
    %43 = arith.addi %0, %c7_i32 : i32
    %44 = arith.index_cast %43 : i32 to index
    %45 = memref.load %arg1[%44] : memref<16xi32, #tpu.memory_space<smem>>
    %46 = arith.index_cast %45 : i32 to index
    %c0_14 = arith.constant 0 : index
    %47 = vector.load %arg3[%46, %c0_14] : memref<64x128xf32, #tpu.memory_space<vmem>>, vector<1x128xf32>
    %c7 = arith.constant 7 : index
    %c0_15 = arith.constant 0 : index
    %48 = vector.load %arg4[%c7, %c0_15] : memref<8x128xf32, #tpu.memory_space<vmem>>, vector<1x128xf32>
    tpu.vector_store %arg4[%c7, %c0_15], %47 {strides = array<i32>} : memref<8x128xf32, #tpu.memory_space<vmem>>, vector<1x128xf32>,
    %c0_16 = arith.constant 0 : index
    %c0_17 = arith.constant 0 : index
    %49 = vector.load %arg4[%c0_16, %c0_17] : memref<8x128xf32, #tpu.memory_space<vmem>>, vector<8x128xf32>
    %cst = arith.constant 5.65685415 : f32
    %50 = vector.broadcast %cst : f32 to vector<8x128xf32>
    %51 = arith.mulf %49, %50 : vector<8x128xf32>
    %c0_18 = arith.constant 0 : index
    %c0_19 = arith.constant 0 : index
    %52 = vector.load %arg4[%c0_18, %c0_19] : memref<8x128xf32, #tpu.memory_space<vmem>>, vector<8x128xf32>
    tpu.vector_store %arg4[%c0_18, %c0_19], %51 {strides = array<i32>} : memref<8x128xf32, #tpu.memory_space<vmem>>, vector<8x128xf32>,
    return
  }
  func.func @transform_0(%arg0: i32, %arg1: memref<16xi32, #tpu.memory_space<smem>>, %arg2: memref<1xi32, #tpu.memory_space<smem>>) -> (i32, i32) {
    %c0_i32 = arith.constant 0 : i32
    %c0_i32_0 = arith.constant 0 : i32
    %c0_i32_1 = arith.constant 0 : i32
    return %c0_i32, %c0_i32_0 : i32, i32
  }
  func.func @transform_1(%arg0: i32, %arg1: memref<16xi32, #tpu.memory_space<smem>>, %arg2: memref<1xi32, #tpu.memory_space<smem>>) -> (i32, i32) {
    %c0_i32 = arith.constant 0 : i32
    %c0_i32_0 = arith.constant 0 : i32
    return %arg0, %c0_i32 : i32, i32
  }
}

</mosaic_0001>

<llo_original>
// kernel: tpu_custom_call.1
$region0: #{tpu_custom_call.1}
  #allocation0 [shape = 'u32[]', space=smem, size = 0x4, offset = 0x4, fixed_abs, tag = 'smem constant byte address 0x4 - core index']
  #allocation1 [shape = 'u32[72,128]{1,0:T(1,128)}', space=vmem, size = 0x9000, scoped, tag = 'internal scratch']
  #allocation2 [shape = 's32[1]{0}', space=sflag, size = 0x4, scoped, tag = 'scoped memory for tpu_custom_call.1']
  #allocation3 [shape = 'u8[512]{0}', space=smem, size = 0x200, scoped, tag = 'prefetched SMEM operand 0']
  #allocation4 [shape = 's32[1]{0:T(128)S(6)}', space=smem, size = 0x200, scoped, tag = 'prefetched SMEM operand 1']
  %s0 = inlined_call_operand.vmem [shape: s32[16], index: 0, kind: input, shape index: {}]
  %s1 = inlined_call_operand.<no memory space> [shape: s32[1], index: 1, kind: input, shape index: {}]
  %s2 = inlined_call_operand.hbm [shape: f32[64,128], index: 2, kind: input, shape index: {}]
  %s3 = inlined_call_operand.hbm [shape: f32[16,128], index: 3, kind: output, shape index: {}]
  %s4 = sld [smem:[#allocation0]]
  $region41: #{tpu_custom_call.1} parent=0
    _
  %s6 = ssub.s32 1, %s4
  %s7 = scalar_select 0, %s6, %s4
  %s9 = sshll.u32 %s0, 4
  %s10 = int_to_ptr.vmem [resolvable:$true] %s9
  %12 = dma.vmem_to_smem %s10, 16, [#allocation3], [#allocation2]
  %13 = sst [smem:[#allocation4]] %s1
  %15 = dma.done [#allocation2], 16
  %16 = sfence
  $region1: #{tpu_custom_call.1} parent=0
    #allocation5 [shape = 'u8[32768]{0}', space=vmem, size = 0x8000, scoped, tag = 'input window, operand 2, single buffered']
    #allocation6 [shape = 's32[2]{0}', space=sflag, size = 0x8, scoped, tag = 'scoped memory for tpu_custom_call.1']
    #allocation7 [shape = 's32[2]{0}', space=sflag, size = 0x8, scoped, tag = 'scoped memory for tpu_custom_call.1']
    #allocation8 [shape = 'u8[8192]{0}', space=vmem, size = 0x2000, scoped, tag = 'output window, operand 0']
    %17 = vsyncpa [#allocation6], 0
    %18 = vsyncpa [#allocation7], 0
    %s19 = scalar_lea.sflag [#allocation7], 1
    %20 = vsyncpa %s19, 0
    loop: start=0, step=1, limit=4
    $region2: #{tpu_custom_call.1} parent=1 // loop_pre_header
      _
    $region3: #{tpu_custom_call.1} parent=1 // loop_header
      %s22 = sphi 0, %s26
      %p23 = scmp.ge.s32.totalorder %s22, 4
      %s30 = sphi 0, %s30
      %s32 = sphi 0, %s30
      %s33 = sphi 0, %s32
      %s47 = sphi 0, %s33
      %s53 = sphi 0, %s55
      %s56 = sphi 0, %s53
      %s57 = sphi 0, %s56
      %s73 = sphi 0, %s57
    $region4: #{tpu_custom_call.1} parent=1 // loop_header_branch
      %25 = sbr.rel (%p23) target = $region8
    $region5: #{tpu_custom_call.1} parent=1 // loop_body
      %s27 = ssub.s32 %s22, 1
      %s28 = ssub.s32 %s22, 2
      %s29 = sadd.s32 %s22, 1
      %s31 = sadd.s32 %s30, 1
      %p34 = scmp.eq.s32.totalorder %s22, 1
      %p35 = scmp.ne.s32.totalorder %s30, %s32
      %p36 = scmp.eq.s32.totalorder %s22, 0
      %p37 = por %p35, %p36
      %p38 = scmp.ne.s32.totalorder %s30, %s32
      %p39 = scmp.eq.s32.totalorder %s27, 1
      %p40 = por %p38, %p39
      %p41 = scmp.ne.s32.totalorder %s32, %s33
      %p42 = scmp.eq.s32.totalorder %s27, 0
      %p43 = por %p41, %p42
      %p44 = scmp.ne.s32.totalorder %s32, %s33
      %p45 = scmp.eq.s32.totalorder %s28, 1
      %p46 = por %p44, %p45
      %p48 = scmp.ne.s32.totalorder %s33, %s47
      %p49 = scmp.eq.s32.totalorder %s28, 0
      %p50 = por %p48, %p49
      %s51 = ssub.s32 %s22, %s29
      %p52 = scmp.eq.s32.totalorder %s51, 0
      %s54 = sadd.s32 %s53, 1
      %s55 = scalar_select %p52, %s53, %s54
      %p58 = pneg %p52
      %p59 = scmp.eq.s32.totalorder %s22, 1
      %p60 = por %p58, %p59
      %p61 = scmp.ne.s32.totalorder %s53, %s56
      %p62 = scmp.eq.s32.totalorder %s22, 0
      %p63 = por %p61, %p62
      %p64 = scmp.ne.s32.totalorder %s53, %s56
      %p65 = scmp.eq.s32.totalorder %s27, 1
      %p66 = por %p64, %p65
      %p67 = scmp.ne.s32.totalorder %s56, %s57
      %p68 = scmp.eq.s32.totalorder %s27, 0
      %p69 = por %p67, %p68
      %p70 = scmp.ne.s32.totalorder %s56, %s57
      %p71 = scmp.eq.s32.totalorder %s28, 1
      %p72 = por %p70, %p71
      %p74 = scmp.ne.s32.totalorder %s57, %s73
      %p75 = scmp.eq.s32.totalorder %s28, 0
      %p76 = por %p74, %p75
      %p77 = scmp.le.s32.totalorder 1, %s22
      %p78 = scmp.lt.s32.totalorder %s22, 3
      %p79 = pnand %p77, %p78
      %p80 = pneg %p79
      // Predicated region
      $region9: #{tpu_custom_call.1} parent=5 // pred_check
        _
      $region10: #{tpu_custom_call.1} parent=5 // pred_check_branch
        %82 = sbr.rel (%p79) target = $region12
      $region11: #{tpu_custom_call.1} parent=5 // pred_region
        %s83 = ssub.s32 %s22, 1
        // Predicated region
        $region13: #{tpu_custom_call.1} parent=11 // pred_check
          %p84 = pneg %p43
        $region14: #{tpu_custom_call.1} parent=11 // pred_check_branch
          %86 = sbr.rel (%p84) target = $region16
        $region15: #{tpu_custom_call.1} parent=11 // pred_region
          %88 = vsyncadd [#allocation6], 0
          %s89 = sshll.u32 %s2, 4
          %s90 = int_to_ptr.hbm [resolvable:$true] %s89
          %s91 = sshll.u32 [#allocation5], 4
          %s92 = int_to_ptr.vmem [resolvable:$true] %s91
          %97 = dma.hbm_to_vmem [thread:$0]  %s90, 1024, %s92, [#allocation6], 128, 128, 8
        $region16: #{tpu_custom_call.1} parent=11 // pred_fallthru
          _
      $region12: #{tpu_custom_call.1} parent=5 // pred_fallthru
        _
      %p98 = scmp.lt.s32.totalorder %s22, 2
      // Predicated region
      $region17: #{tpu_custom_call.1} parent=5 // pred_check
        %p99 = pneg %p98
      $region18: #{tpu_custom_call.1} parent=5 // pred_check_branch
        %101 = sbr.rel (%p99) target = $region20
      $region19: #{tpu_custom_call.1} parent=5 // pred_region
        _
      $region20: #{tpu_custom_call.1} parent=5 // pred_fallthru
        _
      %p102 = scmp.le.s32.totalorder 1, %s22
      %p103 = scmp.lt.s32.totalorder %s22, 3
      %p104 = pnand %p102, %p103
      %p105 = pneg %p104
      // Predicated region
      $region21: #{tpu_custom_call.1} parent=5 // pred_check
        _
      $region22: #{tpu_custom_call.1} parent=5 // pred_check_branch
        %107 = sbr.rel (%p104) target = $region24
      $region23: #{tpu_custom_call.1} parent=5 // pred_region
        %s108 = ssub.s32 %s22, 1
        // Predicated region
        $region25: #{tpu_custom_call.1} parent=23 // pred_check
          %p109 = pneg %p43
        $region26: #{tpu_custom_call.1} parent=23 // pred_check_branch
          %111 = sbr.rel (%p109) target = $region28
        $region27: #{tpu_custom_call.1} parent=23 // pred_region
          %113 = dma.done [#allocation6], 1024
        $region28: #{tpu_custom_call.1} parent=23 // pred_fallthru
          _
        %p114 = pneg %p43
        %p115 = pneg %p40
        %p116 = pneg %p69
        %p117 = pneg %p66
        %s118 = sand.u32 %s56, 1
        %s119 = scalar_lea.sflag [#allocation7], %s118
        %s120 = sand.u32 %s56, 1
        %s121 = smul.addr %s120, 8
        %s122 = scalar_lea.vmem [#allocation8], %s121
        %s123 = smul.u32 %s27, 8
        %s124 = sld [smem:[#allocation3 + %s123]]
        %s125 = scalar_lea.vmem [#allocation5], %s124
        %v126 = vld [vmem:[%s125] sm:$0x1]
        %127 = vst [vmem:[%s122] sm:$0x1] %v126
        %s128 = sadd.s32 %s123, 1
        %s129 = sld [smem:[#allocation3 + %s128]]
        %s130 = scalar_lea.vmem [#allocation5], %s129
        %v131 = vld [vmem:[%s130] sm:$0x1]
        %132 = vst [vmem:[%s122 + $0x1] sm:$0x1] %v131
        %s133 = sadd.s32 %s123, 2
        %s134 = sld [smem:[#allocation3 + %s133]]
        %s135 = scalar_lea.vmem [#allocation5], %s134
        %v136 = vld [vmem:[%s135] sm:$0x1]
        %137 = vst [vmem:[%s122 + $0x2] sm:$0x1] %v136
        %s138 = sadd.s32 %s123, 3
        %s139 = sld [smem:[#allocation3 + %s138]]
        %s140 = scalar_lea.vmem [#allocation5], %s139
        %v141 = vld [vmem:[%s140] sm:$0x1]
        %142 = vst [vmem:[%s122 + $0x3] sm:$0x1] %v141
        %s143 = sadd.s32 %s123, 4
        %s144 = sld [smem:[#allocation3 + %s143]]
        %s145 = scalar_lea.vmem [#allocation5], %s144
        %v146 = vld [vmem:[%s145] sm:$0x1]
        %147 = vst [vmem:[%s122 + $0x4] sm:$0x1] %v146
        %s148 = sadd.s32 %s123, 5
        %s149 = sld [smem:[#allocation3 + %s148]]
        %s150 = scalar_lea.vmem [#allocation5], %s149
        %v151 = vld [vmem:[%s150] sm:$0x1]
        %152 = vst [vmem:[%s122 + $0x5] sm:$0x1] %v151
        %s153 = sadd.s32 %s123, 6
        %s154 = sld [smem:[#allocation3 + %s153]]
        %s155 = scalar_lea.vmem [#allocation5], %s154
        %v156 = vld [vmem:[%s155] sm:$0x1]
        %157 = vst [vmem:[%s122 + $0x6] sm:$0x1] %v156
        %s158 = sadd.s32 %s123, 7
        %s159 = sld [smem:[#allocation3 + %s158]]
        %s160 = scalar_lea.vmem [#allocation5], %s159
        %v161 = vld [vmem:[%s160] sm:$0x1]
        %162 = vst [vmem:[%s122 + $0x7] sm:$0x1] %v161
        %v163 = vld [vmem:[%s122] sm:$0xff]
        %v164 = vmul.f32 %v163, 5.656854
        %165 = vst [vmem:[%s122] sm:$0xff] %v164
        %s166 = sand.u32 %s56, 1
        %s167 = scalar_lea.sflag [#allocation7], %s166
        %s168 = sand.u32 %s56, 1
        %s169 = smul.addr %s168, 8
        %s170 = scalar_lea.vmem [#allocation8], %s169
        // Predicated region
        $region29: #{tpu_custom_call.1} parent=23 // pred_check
          %p171 = pneg %p66
        $region30: #{tpu_custom_call.1} parent=23 // pred_check_branch
          %173 = sbr.rel (%p171) target = $region32
        $region31: #{tpu_custom_call.1} parent=23 // pred_region
          %175 = vsyncadd %s167, 0
          %s176 = smul.addr %s27, 8
          %s177 = scalar_lea.hbm %s3, %s176
          %s179 = sshll.u32 %s170, 4
          %s180 = int_to_ptr.vmem [resolvable:$true] %s179
          %s181 = sshll.u32 %s177, 4
          %s182 = int_to_ptr.hbm [resolvable:$true] %s181
          %184 = dma.vmem_to_hbm [thread:$0]  %s180, 128, %s182, %s167
        $region32: #{tpu_custom_call.1} parent=23 // pred_fallthru
          _
      $region24: #{tpu_custom_call.1} parent=5 // pred_fallthru
        _
      %p185 = scmp.le.s32.totalorder 2, %s22
      // Predicated region
      $region33: #{tpu_custom_call.1} parent=5 // pred_check
        %p186 = pneg %p185
      $region34: #{tpu_custom_call.1} parent=5 // pred_check_branch
        %188 = sbr.rel (%p186) target = $region36
      $region35: #{tpu_custom_call.1} parent=5 // pred_region
        %s189 = ssub.s32 %s22, 2
        // Predicated region
        $region37: #{tpu_custom_call.1} parent=35 // pred_check
          %p190 = pneg %p72
        $region38: #{tpu_custom_call.1} parent=35 // pred_check_branch
          %192 = sbr.rel (%p190) target = $region40
        $region39: #{tpu_custom_call.1} parent=35 // pred_region
          %s193 = sand.u32 %s57, 1
          %s194 = scalar_lea.sflag [#allocation7], %s193
          %s195 = sand.u32 %s57, 1
          %s196 = smul.addr %s195, 8
          %s197 = scalar_lea.vmem [#allocation8], %s196
          %199 = dma.done %s194, 128
        $region40: #{tpu_custom_call.1} parent=35 // pred_fallthru
          _
      $region36: #{tpu_custom_call.1} parent=5 // pred_fallthru
        _
    $region6: #{tpu_custom_call.1} parent=1 // loop_footer
      %s26 = sadd.s32 1, %s22
    $region7: #{tpu_custom_call.1} parent=1 // loop_footer_branch
      %21 = sbr.rel target = $region3
    $region8: #{tpu_custom_call.1} parent=1 // loop_exit
      _
    %200 = vsyncpa [#allocation6], 1
    %s201 = scalar_lea.sflag [#allocation6], 1
    %202 = vsyncpa %s201, 1
    %203 = vsyncpa [#allocation7], 1
    %s204 = scalar_lea.sflag [#allocation7], 1
    %205 = vsyncpa %s204, 1

</llo_original>
